<compile_context>
chip_gen: v5e
topology: v5e:2x2
jax: 0.10.0
libtpu: 0.0.40
codegen_flags: <defaults>
</compile_context>

<pallas_src>
import functools

import jax
import jax.numpy as jnp
from jax.experimental import pallas as pl
from jax.experimental.pallas import tpu as pltpu


def _round_up(x, m):
    return ((x + m - 1) // m) * m


def _patch_embed_kernel(x_ref, w_ref, b_ref, o_ref):
    # x_ref: (tm, K) bf16, w_ref: (E, K) bf16, b_ref: (1, E) f32, o_ref: (tm, E) f32.
    # Contract over K with the rhs transposed (W is (E, K)) -> f32 accumulator on MXU.
    acc = jax.lax.dot_general(
        x_ref[...], w_ref[...],
        dimension_numbers=(((1,), (1,)), ((), ())),
        preferred_element_type=jnp.float32)
    o_ref[...] = acc + b_ref[...]          # bias added in f32, output kept f32


@functools.partial(jax.jit, static_argnames=("patch_size",))
def token_learner_global_forward(x, weight, bias, patch_size):
    """Pallas implementation of TokenLearner_Global.forward.

    x:      (B, C, D, H, W)   float32   (NCDHW, same as PyTorch)
    weight: (E, C, pd, ph, pw)          (Conv3d weight layout)
    bias:   (E,)
    returns (B, num_patches, E) float32
    """
    B, C, D, H, W = x.shape
    E = weight.shape[0]
    pd, ph, pw = patch_size
    gd, gh, gw = D // pd, H // ph, W // pw
    P = gd * gh * gw                      # num_patches
    K = C * pd * ph * pw                  # flattened patch length
    M = B * P

    # ---- patch extraction (glue). When the patch covers the whole volume
    # (the module's default config) this is a pure reshape: no data movement.
    if (gd, gh, gw) == (1, 1, 1):
        x2d = x.reshape(M, K)
    else:
        # TODO(synk): for the general multi-patch case, move the patch gather
        # into the kernel via BlockSpec index_maps over (gd, gh, gw) to avoid
        # materializing the transposed copy in HBM.
        xp = x.reshape(B, C, gd, pd, gh, ph, gw, pw)
        xp = xp.transpose(0, 2, 4, 6, 1, 3, 5, 7)   # (B, gd, gh, gw, C, pd, ph, pw)
        x2d = xp.reshape(M, K)

    # bf16 MXU inputs, f32 accumulation / bias.
    x2d = x2d.astype(jnp.bfloat16)
    w2d = weight.reshape(E, K).astype(jnp.bfloat16)   # (E, K) -- no transpose
    b2d = bias.reshape(1, E).astype(jnp.float32)

    # ---- M tiling: multiple of 8 sublanes, capped so the (tm,K)+(tm,E) tiles
    # (double-buffered) plus the resident (E,K) weight stay far under the
    # 32 MiB scoped-VMEM default on every generation (incl. v7x's 64 MiB).
    tm = 512 if M >= 512 else _round_up(M, 8)
    M_pad = _round_up(M, tm)
    if M_pad != M:
        x2d = jnp.pad(x2d, ((0, M_pad - M), (0, 0)))

    grid = (M_pad // tm,)

    out2d = pl.pallas_call(
        _patch_embed_kernel,
        out_shape=jax.ShapeDtypeStruct((M_pad, E), jnp.float32),
        grid_spec=pltpu.PrefetchScalarGridSpec(
            num_scalar_prefetch=0,
            grid=grid,
            in_specs=[
                pl.BlockSpec((tm, K), lambda i: (i, 0)),   # activations: tiled over M
                pl.BlockSpec((E, K), lambda i: (0, 0)),    # weight: resident in VMEM
                pl.BlockSpec((1, E), lambda i: (0, 0)),    # bias:   resident in VMEM
            ],
            out_specs=pl.BlockSpec((tm, E), lambda i: (i, 0)),
        ),
        compiler_params=pltpu.CompilerParams(
            dimension_semantics=("parallel",)),
    )(x2d, w2d, b2d)

    return out2d[:M].reshape(B, P, E)


if __name__ == "__main__":
    # Module defaults: img_size = patch_size = (4, 8, 8), in_chans=1, embed_dim=256
    img_size = (4, 8, 8)
    patch_size = (4, 8, 8)
    in_chans = 1
    embed_dim = 256
    B = 2

    key = jax.random.PRNGKey(0)
    kx, kw, kb = jax.random.split(key, 3)

    x = jax.random.normal(kx, (B, in_chans, *img_size), dtype=jnp.float32)

    # Deterministic synthetic Conv3d parameters (shapes from nn.Conv3d).
    fan_in = in_chans * patch_size[0] * patch_size[1] * patch_size[2]
    bound = 1.0 / (fan_in ** 0.5)
    weight = jax.random.uniform(
        kw, (embed_dim, in_chans, *patch_size), jnp.float32, -bound, bound)
    bias = jax.random.uniform(kb, (embed_dim,), jnp.float32, -bound, bound)

    out = token_learner_global_forward(x, weight, bias, patch_size)
    out = jax.block_until_ready(out)

    # Reference check (same patch-embedding math; bf16 inputs + f32 accumulation
    # to mirror the kernel's MXU precision).
    gd, gh, gw = (img_size[i] // patch_size[i] for i in range(3))
    P = gd * gh * gw
    xp = x.reshape(B, in_chans, gd, patch_size[0], gh, patch_size[1], gw, patch_size[2])
    xp = xp.transpose(0, 2, 4, 6, 1, 3, 5, 7).reshape(B * P, -1)
    w2d = weight.reshape(embed_dim, -1)
    ref = jax.lax.dot_general(
        xp.astype(jnp.bfloat16), w2d.astype(jnp.bfloat16),
        dimension_numbers=(((1,), (1,)), ((), ())),
        preferred_element_type=jnp.float32) + bias
    ref = ref.reshape(B, P, embed_dim)

    assert out.shape == (B, P, embed_dim)
    assert out.dtype == jnp.float32
    assert jnp.allclose(out, ref, atol=1e-2, rtol=1e-2)

    print("KERNEL_OK")
</pallas_src>

<mosaic_0001>
module attributes {stable_mosaic.version = 11 : i64} {
  func.func @_patch_embed_kernel(%arg0: i32, %arg1: memref<8x256xbf16, #tpu.memory_space<vmem>>, %arg2: memref<256x256xbf16, #tpu.memory_space<vmem>>, %arg3: memref<1x256xf32, #tpu.memory_space<vmem>>, %arg4: memref<8x256xf32, #tpu.memory_space<vmem>>) attributes {dimension_semantics = [#tpu.dimension_semantics<parallel>], iteration_bounds = array<i64: 1>, scalar_prefetch = 0 : i64, scratch_operands = 0 : i64, tpu.core_type = #tpu.core_type<tc>, window_params = [{transform_indices = @transform_0, window_bounds = array<i64: 8, 256>}, {pipeline_mode = #tpu.pipeline_mode<synchronous>, transform_indices = @transform_1, window_bounds = array<i64: 256, 256>}, {pipeline_mode = #tpu.pipeline_mode<synchronous>, transform_indices = @transform_2, window_bounds = array<i64: 1, 256>}, {transform_indices = @transform_3, window_bounds = array<i64: 8, 256>}]} {
    %c0 = arith.constant 0 : index
    %c0_0 = arith.constant 0 : index
    %0 = vector.load %arg1[%c0, %c0_0] : memref<8x256xbf16, #tpu.memory_space<vmem>>, vector<8x256xbf16>
    %c0_1 = arith.constant 0 : index
    %c0_2 = arith.constant 0 : index
    %1 = vector.load %arg2[%c0_1, %c0_2] : memref<256x256xbf16, #tpu.memory_space<vmem>>, vector<256x256xbf16>
    %cst = arith.constant dense<0.000000e+00> : vector<8x256xf32>
    %2 = tpu.matmul %0, %1, %cst {dimension_numbers = #tpu.dot_dimension_numbers<[1], [1], [0], [0], [0, 0, 1, 0], [], []>} : vector<8x256xbf16>, vector<256x256xbf16>, vector<8x256xf32> -> vector<8x256xf32>
    %c0_3 = arith.constant 0 : index
    %c0_4 = arith.constant 0 : index
    %3 = vector.load %arg3[%c0_3, %c0_4] : memref<1x256xf32, #tpu.memory_space<vmem>>, vector<1x256xf32>
    %4 = vector.broadcast %3 : vector<1x256xf32> to vector<8x256xf32>
    %5 = arith.addf %2, %4 : vector<8x256xf32>
    %c0_5 = arith.constant 0 : index
    %c0_6 = arith.constant 0 : index
    %6 = vector.load %arg4[%c0_5, %c0_6] : memref<8x256xf32, #tpu.memory_space<vmem>>, vector<8x256xf32>
    tpu.vector_store %arg4[%c0_5, %c0_6], %5 {strides = array<i32>} : memref<8x256xf32, #tpu.memory_space<vmem>>, vector<8x256xf32>,
    return
  }
  func.func @transform_0(%arg0: i32) -> (i32, i32) {
    %c0_i32 = arith.constant 0 : i32
    %c0_i32_0 = arith.constant 0 : i32
    return %arg0, %c0_i32 : i32, i32
  }
  func.func @transform_1(%arg0: i32) -> (i32, i32) {
    %c0_i32 = arith.constant 0 : i32
    %c0_i32_0 = arith.constant 0 : i32
    %c0_i32_1 = arith.constant 0 : i32
    return %c0_i32, %c0_i32_0 : i32, i32
  }
  func.func @transform_2(%arg0: i32) -> (i32, i32) {
    %c0_i32 = arith.constant 0 : i32
    %c0_i32_0 = arith.constant 0 : i32
    %c0_i32_1 = arith.constant 0 : i32
    return %c0_i32, %c0_i32_0 : i32, i32
  }
  func.func @transform_3(%arg0: i32) -> (i32, i32) {
    %c0_i32 = arith.constant 0 : i32
    %c0_i32_0 = arith.constant 0 : i32
    return %arg0, %c0_i32 : i32, i32
  }
}

</mosaic_0001>

<llo_original>
// kernel: token_learner_global_forward.1
$region0: #{token_learner_global_forward.1}
  #allocation0 [shape = 'u32[]', space=smem, size = 0x4, offset = 0x4, fixed_abs, tag = 'smem constant byte address 0x4 - core index']
  #allocation1 [shape = 'u32[72,128]{1,0:T(1,128)}', space=vmem, size = 0x9000, scoped, tag = 'internal scratch']
  %s0 = inlined_call_operand.vmem [shape: bf16[8,256], index: 0, kind: input, shape index: {}]
  %s1 = inlined_call_operand.vmem [shape: bf16[256,256], index: 1, kind: input, shape index: {}]
  %s2 = inlined_call_operand.vmem [shape: f32[1,256], index: 2, kind: input, shape index: {}]
  %s3 = inlined_call_operand.vmem [shape: f32[8,256], index: 3, kind: output, shape index: {}]
  %s4 = sld [smem:[#allocation0]]
  $region22: #{token_learner_global_forward.1} parent=0
    _
  %s6 = ssub.s32 1, %s4
  %s7 = scalar_select 0, %s6, %s4
  // Predicated region
  $region2: #{token_learner_global_forward.1} parent=0 // pred_check
    _
  $region3: #{token_learner_global_forward.1} parent=0 // pred_check_branch
    %9 = sbr.rel (0) target = $region5
  $region4: #{token_learner_global_forward.1} parent=0 // pred_region
    _
  $region5: #{token_learner_global_forward.1} parent=0 // pred_fallthru
    _
  // Predicated region
  $region6: #{token_learner_global_forward.1} parent=0 // pred_check
    _
  $region7: #{token_learner_global_forward.1} parent=0 // pred_check_branch
    %11 = sbr.rel (0) target = $region9
  $region8: #{token_learner_global_forward.1} parent=0 // pred_region
    _
  $region9: #{token_learner_global_forward.1} parent=0 // pred_fallthru
    _
  // Predicated region
  $region10: #{token_learner_global_forward.1} parent=0 // pred_check
    _
  $region11: #{token_learner_global_forward.1} parent=0 // pred_check_branch
    %13 = sbr.rel (0) target = $region13
  $region12: #{token_learner_global_forward.1} parent=0 // pred_region
    _
  $region13: #{token_learner_global_forward.1} parent=0 // pred_fallthru
    _
  %v14 = vld [vmem:[%s0] sm:$0xff]
  %v15 = vld [vmem:[%s1] sm:$0xff]
  %v16 = vld [vmem:[%s1 + $0x8] sm:$0xff]
  %v17 = vld [vmem:[%s1 + $0x10] sm:$0xff]
  %v18 = vld [vmem:[%s1 + $0x18] sm:$0xff]
  %v19 = vld [vmem:[%s1 + $0x20] sm:$0xff]
  %v20 = vld [vmem:[%s1 + $0x28] sm:$0xff]
  %v21 = vld [vmem:[%s1 + $0x30] sm:$0xff]
  %v22 = vld [vmem:[%s1 + $0x38] sm:$0xff]
  %v23 = vld [vmem:[%s1 + $0x40] sm:$0xff]
  %v24 = vld [vmem:[%s1 + $0x48] sm:$0xff]
  %v25 = vld [vmem:[%s1 + $0x50] sm:$0xff]
  %v26 = vld [vmem:[%s1 + $0x58] sm:$0xff]
  %v27 = vld [vmem:[%s1 + $0x60] sm:$0xff]
  %v28 = vld [vmem:[%s1 + $0x68] sm:$0xff]
  %v29 = vld [vmem:[%s1 + $0x70] sm:$0xff]
  %v30 = vld [vmem:[%s1 + $0x78] sm:$0xff]
  %v31 = vld [vmem:[%s1 + $0x80] sm:$0xff]
  %v32 = vld [vmem:[%s1 + $0x88] sm:$0xff]
  %v33 = vld [vmem:[%s1 + $0x90] sm:$0xff]
  %v34 = vld [vmem:[%s1 + $0x98] sm:$0xff]
  %v35 = vld [vmem:[%s1 + $0xa0] sm:$0xff]
  %v36 = vld [vmem:[%s1 + $0xa8] sm:$0xff]
  %v37 = vld [vmem:[%s1 + $0xb0] sm:$0xff]
  %v38 = vld [vmem:[%s1 + $0xb8] sm:$0xff]
  %v39 = vld [vmem:[%s1 + $0xc0] sm:$0xff]
  %v40 = vld [vmem:[%s1 + $0xc8] sm:$0xff]
  %v41 = vld [vmem:[%s1 + $0xd0] sm:$0xff]
  %v42 = vld [vmem:[%s1 + $0xd8] sm:$0xff]
  %v43 = vld [vmem:[%s1 + $0xe0] sm:$0xff]
  %v44 = vld [vmem:[%s1 + $0xe8] sm:$0xff]
  %v45 = vld [vmem:[%s1 + $0xf0] sm:$0xff]
  %v46 = vld [vmem:[%s1 + $0xf8] sm:$0xff]
  %v47 = vld [vmem:[%s2] sm:$0x3]
  %v49 = vperm.slane %v47, 0
  %v50 = vperm.slane %v47, 1
  %v54 = vunpack.c.l.b16 %v14
  %v55 = vunpack.c.h.b16 %v14
  %v56 = vpack.c.b16 %v54, %v54
  %v57 = vpack.c.b16 %v55, %v55
  %v92 = vunpack.c.l.b16 %v15
  %v93 = vunpack.c.h.b16 %v15
  %v94 = vunpack.c.l.b16 %v16
  %v95 = vunpack.c.h.b16 %v16
  %v96 = vunpack.c.l.b16 %v17
  %v97 = vunpack.c.h.b16 %v17
  %v98 = vunpack.c.l.b16 %v18
  %v99 = vunpack.c.h.b16 %v18
  %v100 = vunpack.c.l.b16 %v19
  %v101 = vunpack.c.h.b16 %v19
  %v102 = vunpack.c.l.b16 %v20
  %v103 = vunpack.c.h.b16 %v20
  %v104 = vunpack.c.l.b16 %v21
  %v105 = vunpack.c.h.b16 %v21
  %v106 = vunpack.c.l.b16 %v22
  %v107 = vunpack.c.h.b16 %v22
  %v108 = vunpack.c.l.b16 %v23
  %v109 = vunpack.c.h.b16 %v23
  %v110 = vunpack.c.l.b16 %v24
  %v111 = vunpack.c.h.b16 %v24
  %v112 = vunpack.c.l.b16 %v25
  %v113 = vunpack.c.h.b16 %v25
  %v114 = vunpack.c.l.b16 %v26
  %v115 = vunpack.c.h.b16 %v26
  %v116 = vunpack.c.l.b16 %v27
  %v117 = vunpack.c.h.b16 %v27
  %v118 = vunpack.c.l.b16 %v28
  %v119 = vunpack.c.h.b16 %v28
  %v120 = vunpack.c.l.b16 %v29
  %v121 = vunpack.c.h.b16 %v29
  %v122 = vunpack.c.l.b16 %v30
  %v123 = vunpack.c.h.b16 %v30
  %v124 = vunpack.c.l.b16 %v31
  %v125 = vunpack.c.h.b16 %v31
  %v126 = vunpack.c.l.b16 %v32
  %v127 = vunpack.c.h.b16 %v32
  %v128 = vunpack.c.l.b16 %v33
  %v129 = vunpack.c.h.b16 %v33
  %v130 = vunpack.c.l.b16 %v34
  %v131 = vunpack.c.h.b16 %v34
  %v132 = vunpack.c.l.b16 %v35
  %v133 = vunpack.c.h.b16 %v35
  %v134 = vunpack.c.l.b16 %v36
  %v135 = vunpack.c.h.b16 %v36
  %v136 = vunpack.c.l.b16 %v37
  %v137 = vunpack.c.h.b16 %v37
  %v138 = vunpack.c.l.b16 %v38
  %v139 = vunpack.c.h.b16 %v38
  %v140 = vunpack.c.l.b16 %v39
  %v141 = vunpack.c.h.b16 %v39
  %v142 = vunpack.c.l.b16 %v40
  %v143 = vunpack.c.h.b16 %v40
  %v144 = vunpack.c.l.b16 %v41
  %v145 = vunpack.c.h.b16 %v41
  %v146 = vunpack.c.l.b16 %v42
  %v147 = vunpack.c.h.b16 %v42
  %v148 = vunpack.c.l.b16 %v43
  %v149 = vunpack.c.h.b16 %v43
  %v150 = vunpack.c.l.b16 %v44
  %v151 = vunpack.c.h.b16 %v44
  %v152 = vunpack.c.l.b16 %v45
  %v153 = vunpack.c.h.b16 %v45
  %v154 = vunpack.c.l.b16 %v46
  %v155 = vunpack.c.h.b16 %v46
  %v156 = vpack.c.b16 %v94, %v92
  %v157 = vpack.c.b16 %v95, %v93
  %v158 = vpack.c.b16 %v98, %v96
  %v159 = vpack.c.b16 %v99, %v97
  %v160 = vpack.c.b16 %v102, %v100
  %v161 = vpack.c.b16 %v103, %v101
  %v162 = vpack.c.b16 %v106, %v104
  %v163 = vpack.c.b16 %v107, %v105
  %v164 = vpack.c.b16 %v110, %v108
  %v165 = vpack.c.b16 %v111, %v109
  %v166 = vpack.c.b16 %v114, %v112
  %v167 = vpack.c.b16 %v115, %v113
  %v168 = vpack.c.b16 %v118, %v116
  %v169 = vpack.c.b16 %v119, %v117
  %v170 = vpack.c.b16 %v122, %v120
  %v171 = vpack.c.b16 %v123, %v121
  %v172 = vpack.c.b16 %v126, %v124
  %v173 = vpack.c.b16 %v127, %v125
  %v174 = vpack.c.b16 %v130, %v128
  %v175 = vpack.c.b16 %v131, %v129
  %v176 = vpack.c.b16 %v134, %v132
  %v177 = vpack.c.b16 %v135, %v133
  %v178 = vpack.c.b16 %v138, %v136
  %v179 = vpack.c.b16 %v139, %v137
  %v180 = vpack.c.b16 %v142, %v140
  %v181 = vpack.c.b16 %v143, %v141
  %v182 = vpack.c.b16 %v146, %v144
  %v183 = vpack.c.b16 %v147, %v145
  %v184 = vpack.c.b16 %v150, %v148
  %v185 = vpack.c.b16 %v151, %v149
  %v186 = vpack.c.b16 %v154, %v152
  %v187 = vpack.c.b16 %v155, %v153
  %220 = vmatpush.bf16.xpose.msra.mxu0 %v170
  %221 = vmatpush.bf16.xpose.msra.mxu0 %v168
  %222 = vmatpush.bf16.xpose.msra.mxu0 %v166
  %223 = vmatpush.bf16.xpose.msra.mxu0 %v164
  %224 = vmatpush.bf16.xpose.msra.mxu0 %v162
  %225 = vmatpush.bf16.xpose.msra.mxu0 %v160
  %226 = vmatpush.bf16.xpose.msra.mxu0 %v158
  %227 = vmatpush.bf16.xpose.msra.mxu0 %v156
  %228 = vmatmul.bf16.gmra.mxu0 %v56
  %v229 = vpop.f32.mrf.mxu0
  %v230 = vadd.f32 %v49, %v229
  %v231 = vpop.f32.mrf.mxu0
  %232 = vdwg.mxu0
  %233 = vmatpush.bf16.xpose.msra.mxu0 %v171
  %234 = vmatpush.bf16.xpose.msra.mxu0 %v169
  %235 = vmatpush.bf16.xpose.msra.mxu0 %v167
  %236 = vmatpush.bf16.xpose.msra.mxu0 %v165
  %237 = vmatpush.bf16.xpose.msra.mxu0 %v163
  %238 = vmatpush.bf16.xpose.msra.mxu0 %v161
  %239 = vmatpush.bf16.xpose.msra.mxu0 %v159
  %240 = vmatpush.bf16.xpose.msra.mxu0 %v157
  %241 = vmatmul.bf16.gmra.mxu0 %v57
  %v242 = vpop.f32.mrf.mxu0
  %v243 = vadd.f32 %v230, %v242
  %v244 = vpop.f32.mrf.mxu0
  %245 = vdwg.mxu0
  %246 = vmatpush.bf16.xpose.msra.mxu0 %v186
  %247 = vmatpush.bf16.xpose.msra.mxu0 %v184
  %248 = vmatpush.bf16.xpose.msra.mxu0 %v182
  %249 = vmatpush.bf16.xpose.msra.mxu0 %v180
  %250 = vmatpush.bf16.xpose.msra.mxu0 %v178
  %251 = vmatpush.bf16.xpose.msra.mxu0 %v176
  %252 = vmatpush.bf16.xpose.msra.mxu0 %v174
  %253 = vmatpush.bf16.xpose.msra.mxu0 %v172
  %254 = vmatmul.bf16.gmra.mxu0 %v56
  %v255 = vpop.f32.mrf.mxu0
  %v256 = vadd.f32 %v50, %v255
  %v257 = vpop.f32.mrf.mxu0
  %258 = vdwg.mxu0
  %259 = vmatpush.bf16.xpose.msra.mxu0 %v187
  %260 = vmatpush.bf16.xpose.msra.mxu0 %v185
  %261 = vmatpush.bf16.xpose.msra.mxu0 %v183
  %262 = vmatpush.bf16.xpose.msra.mxu0 %v181
  %263 = vmatpush.bf16.xpose.msra.mxu0 %v179
  %264 = vmatpush.bf16.xpose.msra.mxu0 %v177
  %265 = vmatpush.bf16.xpose.msra.mxu0 %v175
  %266 = vmatpush.bf16.xpose.msra.mxu0 %v173
  %267 = vmatmul.bf16.gmra.mxu0 %v57
  %v268 = vpop.f32.mrf.mxu0
  %v269 = vadd.f32 %v256, %v268
  %v270 = vpop.f32.mrf.mxu0
  %271 = vdwg.mxu0
  %272 = vst [vmem:[%s3] sm:$0xff] %v243
  %273 = vst [vmem:[%s3 + $0x8] sm:$0xff] %v269
  // Predicated region
  $region14: #{token_learner_global_forward.1} parent=0 // pred_check
    _
  $region15: #{token_learner_global_forward.1} parent=0 // pred_check_branch
    %275 = sbr.rel (0) target = $region17
  $region16: #{token_learner_global_forward.1} parent=0 // pred_region
    _
  $region17: #{token_learner_global_forward.1} parent=0 // pred_fallthru
    _
  // Predicated region
  $region18: #{token_learner_global_forward.1} parent=0 // pred_check
    _
  $region19: #{token_learner_global_forward.1} parent=0 // pred_check_branch
    %277 = sbr.rel (0) target = $region21
  $region20: #{token_learner_global_forward.1} parent=0 // pred_region
    _
  $region21: #{token_learner_global_forward.1} parent=0 // pred_fallthru
    _

</llo_original>
